<compile_context>
chip_gen: v7x
topology: tpu7x:2x2x1
jax: 0.10.0
libtpu: 0.0.40
codegen_flags: <defaults>
</compile_context>

<pallas_src>
import math

import jax
import jax.numpy as jnp
from jax import lax
from jax.experimental import pallas as pl
from jax.experimental.pallas import tpu as pltpu


# ---------------------------------------------------------------------------
# Packing helpers (run once, outside the kernel)
# ---------------------------------------------------------------------------
def pack_complex_linear(wr, wi, br, bi):
    """Pack one ComplexLinear so a single real dot performs the complex op.

    With X = [x_re | x_im] (B, 2*in):
      out_re = x_re @ wr - x_im @ wi + (br - bi)
      out_im = x_re @ wi + x_im @ wr + (br + bi)
    =>  W = [[wr, wi], [-wi, wr]]  (2*in, 2*out),  b = [br - bi | br + bi]
    and X @ W + b = [out_re | out_im].
    """
    w = jnp.concatenate(
        [jnp.concatenate([wr, wi], axis=1),
         jnp.concatenate([-wi, wr], axis=1)], axis=0)
    b = jnp.concatenate([br - bi, br + bi], axis=1)
    return w, b


def pack_projection(params):
    """Stack both packed ComplexLinear layers into one weight + one bias slab."""
    w1, b1 = pack_complex_linear(params["w1r"], params["w1i"],
                                 params["b1r"], params["b1i"])
    w2, b2 = pack_complex_linear(params["w2r"], params["w2i"],
                                 params["b2r"], params["b2i"])
    w_all = jnp.concatenate([w1, w2], axis=0)   # (2E + 2H, 2H)
    b_all = jnp.concatenate([b1, b2], axis=0)   # (2, 2H)
    return w_all, b_all


# ---------------------------------------------------------------------------
# Pallas kernel (single, unified int/float-t path)
# ---------------------------------------------------------------------------
def _diffusion_embed_kernel(t_ref, emb_ref, w_ref, b_ref, o_ref):
    """t_ref   : (B, 1)       f32 diffusion steps (int steps arrive exact)
       emb_ref : (S, 2E)      f32 packed [cos | sin] embedding table
       w_ref   : (2E+2H, 2H)  f32 packed complex weights (layer-1 rows, then layer-2)
       b_ref   : (2, 2H)      f32 folded complex biases  (row 0 layer-1, row 1 layer-2)
       o_ref   : (B, 2H)      f32 lane-packed [out_re | out_im]
    """
    S, two_e = emb_ref.shape
    B = t_ref.shape[0]

    t = t_ref[...]                                         # (B, 1)
    max_idx = jnp.float32(S - 1)
    low = jnp.clip(jnp.floor(t), 0.0, max_idx)             # clamp stray indices
    high = jnp.clip(jnp.ceil(t), 0.0, max_idx)
    frac = t - jnp.floor(t)                                # 0 for integer steps

    # Vectorized gather + lerp as one tiny MXU dot.  Rows of `gw` are one-hot
    # for integer t, and (1-frac, frac) pairs for fractional t.
    col = lax.broadcasted_iota(jnp.int32, (B, S), 1).astype(jnp.float32)
    gw = ((col == low).astype(jnp.float32) * (1.0 - frac)
          + (col == high).astype(jnp.float32) * frac)      # (B, S)
    x = jnp.dot(gw, emb_ref[...], preferred_element_type=jnp.float32)   # (B, 2E)

    # ComplexLinear -> ComplexSiLU -> ComplexLinear, each as one fused real dot.
    h = (jnp.dot(x, w_ref[:two_e, :], preferred_element_type=jnp.float32)
         + b_ref[0:1, :])
    h = h * jax.nn.sigmoid(h)                              # SiLU on both planes
    o_ref[...] = (jnp.dot(h, w_ref[two_e:, :], preferred_element_type=jnp.float32)
                  + b_ref[1:2, :])


# ---------------------------------------------------------------------------
# Wrapper
# ---------------------------------------------------------------------------
def diffusion_embedding_forward(t, emb_packed, w_all, b_all, *, packed_output=False):
    """t: (B,) int or float diffusion steps.

    Returns (B, H, 2) like PyTorch, or the lane-packed (B, 2H) = [re | im] slab
    if packed_output=True (recommended when the consumer can take it).
    """
    B = t.shape[0]
    two_h = w_all.shape[1]
    H = two_h // 2

    t_f32 = t.astype(jnp.float32).reshape(B, 1)

    vmem = pl.BlockSpec(memory_space=pltpu.MemorySpace.VMEM)
    out_packed = pl.pallas_call(
        _diffusion_embed_kernel,
        out_shape=jax.ShapeDtypeStruct((B, two_h), jnp.float32),
        in_specs=[vmem, vmem, vmem, vmem],
        out_specs=vmem,
    )(t_f32, emb_packed, w_all, b_all)

    if packed_output:
        return out_packed
    # Restack packed [out_re | out_im] to the PyTorch layout (B, H, 2).
    return jnp.stack([out_packed[:, :H], out_packed[:, H:]], axis=-1)


# ---------------------------------------------------------------------------
# Embedding table, parameter init
# ---------------------------------------------------------------------------
def build_embedding(max_step, embed_dim):
    steps = jnp.arange(max_step, dtype=jnp.float32)[:, None]       # [S, 1]
    dims = jnp.arange(embed_dim, dtype=jnp.float32)[None, :]       # [1, E]
    table = steps * jnp.exp(-math.log(max_step) * dims / embed_dim)
    # torch.view_as_real(exp(1j*table)) -> (cos, sin)
    return jnp.cos(table), jnp.sin(table)                          # each [S, E]


def init_params(key, embed_dim, hidden_dim):
    k1, k2, k3, k4 = jax.random.split(key, 4)
    std = 0.02  # init_weight_norm: normal(std=0.02) weights, zero biases
    return {
        # weights stored pre-transposed: (in_dim, out_dim)
        "w1r": std * jax.random.normal(k1, (embed_dim, hidden_dim), jnp.float32),
        "w1i": std * jax.random.normal(k2, (embed_dim, hidden_dim), jnp.float32),
        "b1r": jnp.zeros((1, hidden_dim), jnp.float32),
        "b1i": jnp.zeros((1, hidden_dim), jnp.float32),
        "w2r": std * jax.random.normal(k3, (hidden_dim, hidden_dim), jnp.float32),
        "w2i": std * jax.random.normal(k4, (hidden_dim, hidden_dim), jnp.float32),
        "b2r": jnp.zeros((1, hidden_dim), jnp.float32),
        "b2i": jnp.zeros((1, hidden_dim), jnp.float32),
    }


# ---------------------------------------------------------------------------
# Pure-JAX reference (unpacked weights) for correctness check
# ---------------------------------------------------------------------------
def reference_forward(t, emb_cos, emb_sin, p):
    if jnp.issubdtype(t.dtype, jnp.integer):
        xr, xi = emb_cos[t], emb_sin[t]
    else:
        low = jnp.floor(t).astype(jnp.int32)
        high = jnp.ceil(t).astype(jnp.int32)
        w = (t - low.astype(t.dtype))[:, None]
        xr = emb_cos[low] + (emb_cos[high] - emb_cos[low]) * w
        xi = emb_sin[low] + (emb_sin[high] - emb_sin[low]) * w

    def clin(xr, xi, wr, wi, br, bi):
        out_r = (xr @ wr + br) - (xi @ wi + bi)
        out_i = (xi @ wr + br) + (xr @ wi + bi)
        return out_r, out_i

    h_r, h_i = clin(xr, xi, p["w1r"], p["w1i"], p["b1r"], p["b1i"])
    h_r = h_r * jax.nn.sigmoid(h_r)
    h_i = h_i * jax.nn.sigmoid(h_i)
    o_r, o_i = clin(h_r, h_i, p["w2r"], p["w2i"], p["b2r"], p["b2i"])
    return jnp.stack([o_r, o_i], axis=-1)


if __name__ == "__main__":
    MAX_STEP = 50
    EMBED_DIM = 32
    HIDDEN_DIM = 32
    B = 8

    key = jax.random.PRNGKey(0)
    k_t, k_p = jax.random.split(key)

    emb_cos, emb_sin = build_embedding(MAX_STEP, EMBED_DIM)
    emb_packed = jnp.concatenate([emb_cos, emb_sin], axis=1)        # (S, 2E)

    params = init_params(k_p, EMBED_DIM, HIDDEN_DIM)
    w_all, b_all = pack_projection(params)                          # (2E+2H,2H),(2,2H)

    # --- integer diffusion steps ---
    t_int = jax.random.randint(k_t, (B,), 0, MAX_STEP, dtype=jnp.int32)
    out = jax.block_until_ready(
        diffusion_embedding_forward(t_int, emb_packed, w_all, b_all))
    ref = reference_forward(t_int, emb_cos, emb_sin, params)
    assert out.shape == (B, HIDDEN_DIM, 2), out.shape
    assert jnp.allclose(out, ref, atol=1e-5, rtol=1e-4), "int-t mismatch"

    # packed (lane-dense) output path: same numbers, no restack op
    out_packed = jax.block_until_ready(
        diffusion_embedding_forward(t_int, emb_packed, w_all, b_all,
                                    packed_output=True))
    assert out_packed.shape == (B, 2 * HIDDEN_DIM), out_packed.shape
    repacked = jnp.stack([out_packed[:, :HIDDEN_DIM], out_packed[:, HIDDEN_DIM:]],
                         axis=-1)
    assert jnp.allclose(repacked, ref, atol=1e-5, rtol=1e-4), "packed mismatch"

    # --- float diffusion steps (lerp fused into the same kernel) ---
    t_float = jax.random.uniform(k_t, (B,), jnp.float32, 0.0, MAX_STEP - 1)
    out_f = jax.block_until_ready(
        diffusion_embedding_forward(t_float, emb_packed, w_all, b_all))
    ref_f = reference_forward(t_float, emb_cos, emb_sin, params)
    assert out_f.shape == (B, HIDDEN_DIM, 2), out_f.shape
    assert jnp.allclose(out_f, ref_f, atol=3e-5, rtol=1e-4), "float-t mismatch"

    print("KERNEL_OK")
</pallas_src>

<mosaic_0001>
module attributes {stable_mosaic.version = 11 : i64} {
  func.func @_diffusion_embed_kernel(%arg0: memref<8x1xf32, #tpu.memory_space<vmem>>, %arg1: memref<50x64xf32, #tpu.memory_space<vmem>>, %arg2: memref<128x64xf32, #tpu.memory_space<vmem>>, %arg3: memref<2x64xf32, #tpu.memory_space<vmem>>, %arg4: memref<8x64xf32, #tpu.memory_space<vmem>>) attributes {dimension_semantics = [], scalar_prefetch = 0 : i64, scratch_operands = 0 : i64, tpu.core_type = #tpu.core_type<tc>} {
    %c0 = arith.constant 0 : index
    %c0_0 = arith.constant 0 : index
    %0 = vector.load %arg0[%c0, %c0_0] : memref<8x1xf32, #tpu.memory_space<vmem>>, vector<8x1xf32>
    %1 = math.floor %0 : vector<8x1xf32>
    %cst = arith.constant 0.000000e+00 : f32
    %cst_1 = arith.constant 4.900000e+01 : f32
    %2 = vector.broadcast %cst : f32 to vector<8x1xf32>
    %3 = arith.maximumf %2, %1 : vector<8x1xf32>
    %4 = vector.broadcast %cst_1 : f32 to vector<8x1xf32>
    %5 = arith.minimumf %4, %3 : vector<8x1xf32>
    %6 = math.ceil %0 : vector<8x1xf32>
    %cst_2 = arith.constant 0.000000e+00 : f32
    %cst_3 = arith.constant 4.900000e+01 : f32
    %7 = vector.broadcast %cst_2 : f32 to vector<8x1xf32>
    %8 = arith.maximumf %7, %6 : vector<8x1xf32>
    %9 = vector.broadcast %cst_3 : f32 to vector<8x1xf32>
    %10 = arith.minimumf %9, %8 : vector<8x1xf32>
    %11 = math.floor %0 : vector<8x1xf32>
    %12 = arith.subf %0, %11 : vector<8x1xf32>
    %13 = tpu.iota {dimensions = array<i32: 1>} : vector<8x50xi32>
    %14 = arith.sitofp %13 : vector<8x50xi32> to vector<8x50xf32>
    %15 = vector.broadcast %5 : vector<8x1xf32> to vector<8x50xf32>
    %16 = arith.cmpf oeq, %14, %15 : vector<8x50xf32>
    %17 = arith.extui %16 : vector<8x50xi1> to vector<8x50xi32>
    %18 = arith.sitofp %17 : vector<8x50xi32> to vector<8x50xf32>
    %cst_4 = arith.constant 1.000000e+00 : f32
    %19 = vector.broadcast %cst_4 : f32 to vector<8x1xf32>
    %20 = arith.subf %19, %12 : vector<8x1xf32>
    %21 = vector.broadcast %20 : vector<8x1xf32> to vector<8x50xf32>
    %22 = arith.mulf %18, %21 : vector<8x50xf32>
    %23 = vector.broadcast %10 : vector<8x1xf32> to vector<8x50xf32>
    %24 = arith.cmpf oeq, %14, %23 : vector<8x50xf32>
    %25 = arith.extui %24 : vector<8x50xi1> to vector<8x50xi32>
    %26 = arith.sitofp %25 : vector<8x50xi32> to vector<8x50xf32>
    %27 = vector.broadcast %12 : vector<8x1xf32> to vector<8x50xf32>
    %28 = arith.mulf %26, %27 : vector<8x50xf32>
    %29 = arith.addf %22, %28 : vector<8x50xf32>
    %c0_5 = arith.constant 0 : index
    %c0_6 = arith.constant 0 : index
    %30 = vector.load %arg1[%c0_5, %c0_6] : memref<50x64xf32, #tpu.memory_space<vmem>>, vector<50x64xf32>
    %cst_7 = arith.constant dense<0.000000e+00> : vector<8x64xf32>
    %31 = tpu.matmul %29, %30, %cst_7 {dimension_numbers = #tpu.dot_dimension_numbers<[1], [0], [0], [1], [0, 0, 1, 1], [], []>} : vector<8x50xf32>, vector<50x64xf32>, vector<8x64xf32> -> vector<8x64xf32>
    %c0_8 = arith.constant 0 : index
    %c0_9 = arith.constant 0 : index
    %32 = vector.load %arg2[%c0_8, %c0_9] : memref<128x64xf32, #tpu.memory_space<vmem>>, vector<64x64xf32>
    %cst_10 = arith.constant dense<0.000000e+00> : vector<8x64xf32>
    %33 = tpu.matmul %31, %32, %cst_10 {dimension_numbers = #tpu.dot_dimension_numbers<[1], [0], [0], [1], [0, 0, 1, 1], [], []>} : vector<8x64xf32>, vector<64x64xf32>, vector<8x64xf32> -> vector<8x64xf32>
    %c0_11 = arith.constant 0 : index
    %c0_12 = arith.constant 0 : index
    %34 = vector.load %arg3[%c0_11, %c0_12] : memref<2x64xf32, #tpu.memory_space<vmem>>, vector<1x64xf32>
    %35 = vector.broadcast %34 : vector<1x64xf32> to vector<8x64xf32>
    %36 = arith.addf %33, %35 : vector<8x64xf32>
    %37 = arith.negf %36 : vector<8x64xf32>
    %38 = math.exp %37 : vector<8x64xf32>
    %cst_13 = arith.constant 1.000000e+00 : f32
    %39 = vector.broadcast %cst_13 : f32 to vector<8x64xf32>
    %40 = arith.addf %39, %38 : vector<8x64xf32>
    %41 = arith.divf %39, %40 : vector<8x64xf32>
    %42 = arith.mulf %36, %41 : vector<8x64xf32>
    %c64 = arith.constant 64 : index
    %c0_14 = arith.constant 0 : index
    %43 = vector.load %arg2[%c64, %c0_14] : memref<128x64xf32, #tpu.memory_space<vmem>>, vector<64x64xf32>
    %cst_15 = arith.constant dense<0.000000e+00> : vector<8x64xf32>
    %44 = tpu.matmul %42, %43, %cst_15 {dimension_numbers = #tpu.dot_dimension_numbers<[1], [0], [0], [1], [0, 0, 1, 1], [], []>} : vector<8x64xf32>, vector<64x64xf32>, vector<8x64xf32> -> vector<8x64xf32>
    %c1 = arith.constant 1 : index
    %c0_16 = arith.constant 0 : index
    %45 = vector.load %arg3[%c1, %c0_16] : memref<2x64xf32, #tpu.memory_space<vmem>>, vector<1x64xf32>
    %46 = vector.broadcast %45 : vector<1x64xf32> to vector<8x64xf32>
    %47 = arith.addf %44, %46 : vector<8x64xf32>
    %c0_17 = arith.constant 0 : index
    %c0_18 = arith.constant 0 : index
    %48 = vector.load %arg4[%c0_17, %c0_18] : memref<8x64xf32, #tpu.memory_space<vmem>>, vector<8x64xf32>
    tpu.vector_store %arg4[%c0_17, %c0_18], %47 {strides = array<i32>} : memref<8x64xf32, #tpu.memory_space<vmem>>, vector<8x64xf32>,
    return
  }
}

</mosaic_0001>

<llo_original>
// kernel: tpu_custom_call.1
$region0: #{tpu_custom_call.1}
  #allocation0 [shape = 'u32[]', space=smem, size = 0x4, offset = 0x4, fixed_abs, tag = 'smem constant byte address 0x4 - core index']
  #allocation1 [shape = 'u32[144,128]{1,0:T(1,128)}', space=vmem, size = 0x12000, scoped, tag = 'internal scratch']
  %s0 = inlined_call_operand.vmem [shape: f32[8,1], index: 0, kind: input, shape index: {}]
  %s1 = inlined_call_operand.vmem [shape: f32[50,64], index: 1, kind: input, shape index: {}]
  %s2 = inlined_call_operand.vmem [shape: f32[128,64], index: 2, kind: input, shape index: {}]
  %s3 = inlined_call_operand.vmem [shape: f32[2,64], index: 3, kind: input, shape index: {}]
  %s4 = inlined_call_operand.hbm [shape: f32[8,64], index: 4, kind: output, shape index: {}]
  %s5 = sld [smem:[#allocation0]]
  $region26: #{tpu_custom_call.1} parent=0
    _
  %s7 = ssub.s32 1, %s5
  %s8 = scalar_select 0, %s7, %s5
  $region1: #{tpu_custom_call.1} parent=0
    #allocation2 [shape = 'u8[4096]{0}', space=vmem, size = 0x1000, scoped, tag = 'output window, operand 0, single buffered']
    #allocation3 [shape = 's32[1]{0}', space=sflag, size = 0x4, scoped, tag = 'scoped memory for tpu_custom_call.1']
    %9 = vsyncpa [#allocation3], 0
    // Predicated region
    $region2: #{tpu_custom_call.1} parent=1 // pred_check
      _
    $region3: #{tpu_custom_call.1} parent=1 // pred_check_branch
      %11 = sbr.rel (0) target = $region5
    $region4: #{tpu_custom_call.1} parent=1 // pred_region
      _
    $region5: #{tpu_custom_call.1} parent=1 // pred_fallthru
      _
    // Predicated region
    $region6: #{tpu_custom_call.1} parent=1 // pred_check
      _
    $region7: #{tpu_custom_call.1} parent=1 // pred_check_branch
      %13 = sbr.rel (0) target = $region9
    $region8: #{tpu_custom_call.1} parent=1 // pred_region
      _
    $region9: #{tpu_custom_call.1} parent=1 // pred_fallthru
      _
    // Predicated region
    $region10: #{tpu_custom_call.1} parent=1 // pred_check
      _
    $region11: #{tpu_custom_call.1} parent=1 // pred_check_branch
      %15 = sbr.rel (0) target = $region13
    $region12: #{tpu_custom_call.1} parent=1 // pred_region
      _
    $region13: #{tpu_custom_call.1} parent=1 // pred_fallthru
      _
    // Predicated region
    $region14: #{tpu_custom_call.1} parent=1 // pred_check
      _
    $region15: #{tpu_custom_call.1} parent=1 // pred_check_branch
      %17 = sbr.rel (0) target = $region17
    $region16: #{tpu_custom_call.1} parent=1 // pred_region
      _
    $region17: #{tpu_custom_call.1} parent=1 // pred_fallthru
      _
    %v18 = vld [vmem:[%s0] sm:$0xff]
    %v19 = vfloor.f32 %v18
    %v20 = vmax.f32 %v19, 0.0
    %v21 = vmin.f32 %v20, 49.0
    %v22 = vceil.f32 %v18
    %v23 = vmax.f32 %v22, 0.0
    %v24 = vmin.f32 %v23, 49.0
    %v25 = vsub.f32 %v18, %v19
    %v26 = vlaneseq
    %v27 = vand.u32 %v26, 127
    %v28 = vcvt.s32.f32 %v27
    %30 = vset.pattern.permute.xlu0 0
    %31 = vperm.xlu0 %30, %v21
    %v32 = vpop.permute.xlu0 %31
    %vm34 = vcmp.eq.f32.partialorder %v28, %v32
    %v35 = vsel %vm34, 1, 0
    %v36 = vcvt.s32.f32 %v35
    %v37 = vsub.f32 1.0, %v25
    %39 = vset.pattern.permute.xlu0 0
    %40 = vperm.xlu0 %39, %v37
    %v41 = vpop.permute.xlu0 %40
    %v43 = vmul.f32 %v36, %v41
    %45 = vset.pattern.permute.xlu0 0
    %46 = vperm.xlu0 %45, %v24
    %v47 = vpop.permute.xlu0 %46
    %vm49 = vcmp.eq.f32.partialorder %v28, %v47
    %v50 = vsel %vm49, 1, 0
    %v51 = vcvt.s32.f32 %v50
    %53 = vset.pattern.permute.xlu0 0
    %54 = vperm.xlu0 %53, %v25
    %v55 = vpop.permute.xlu0 %54
    %v57 = vmul.f32 %v51, %v55
    %v58 = vadd.f32 %v43, %v57
    %v59 = vld [vmem:[%s1] sm:$0xff]
    %v60 = vld [vmem:[%s1 + $0x8] sm:$0xff]
    %v61 = vld [vmem:[%s1 + $0x10] sm:$0xff]
    %v62 = vld [vmem:[%s1 + $0x18] sm:$0xff]
    %v63 = vld [vmem:[%s1 + $0x20] sm:$0xff]
    %v64 = vld [vmem:[%s1 + $0x28] sm:$0xff]
    %v65 = vld [vmem:[%s1 + $0x30] sm:$0x3]
    %vm66 = vcmask 408576
    %v68 = vsel %vm66, %v58, 0
    %vm70 = vcmask 1041408
    %v72 = vsel %vm70, %v65, 0
    %74 = vmatprep.subr.mxu0 0.0
    %75 = vmatpush1.msra.mxu0 %v59
    %76 = vmatprep.subr.mxu0 0.0
    %77 = vmatpush1.msra.mxu0 %v60
    %78 = vmatprep.subr.mxu0 0.0
    %79 = vmatpush1.msra.mxu0 %v61
    %80 = vmatprep.subr.mxu0 0.0
    %81 = vmatpush1.msra.mxu0 %v62
    %82 = vmatprep.subr.mxu0 0.0
    %83 = vmatpush1.msra.mxu0 %v63
    %84 = vmatprep.subr.mxu0 0.0
    %85 = vmatpush1.msra.mxu0 %v64
    %86 = vmatprep.subr.mxu0 0.0
    %87 = vmatpush1.msra.mxu0 %v72
    %88 = vmatprep.subr.mxu0 0.0
    %89 = vmatpush1.msra.mxu0 0.0
    %90 = vmatprep.subr.mxu0 0.0
    %91 = vmatpush1.msra.mxu0 0.0
    %92 = vmatprep.subr.mxu0 0.0
    %93 = vmatpush1.msra.mxu0 0.0
    %94 = vmatprep.subr.mxu0 0.0
    %95 = vmatpush1.msra.mxu0 0.0
    %96 = vmatprep.subr.mxu0 0.0
    %97 = vmatpush1.msra.mxu0 0.0
    %98 = vmatprep.subr.mxu0 0.0
    %99 = vmatpush1.msra.mxu0 0.0
    %100 = vmatprep.subr.mxu0 0.0
    %101 = vmatpush1.msra.mxu0 0.0
    %102 = vmatprep.subr.mxu0 0.0
    %103 = vmatpush1.msra.mxu0 0.0
    %104 = vmatprep.subr.mxu0 0.0
    %105 = vmatpush1.msra.mxu0 0.0
    %106 = vmatprep.subr.mxu0 0.0
    %107 = vmatpush1.msra.mxu0 0.0
    %108 = vmatprep.subr.mxu0 0.0
    %109 = vmatpush1.msra.mxu0 0.0
    %110 = vmatprep.subr.mxu0 0.0
    %111 = vmatpush1.msra.mxu0 0.0
    %112 = vmatprep.subr.mxu0 0.0
    %113 = vmatpush1.msra.mxu0 0.0
    %114 = vmatprep.subr.mxu0 0.0
    %115 = vmatpush1.msra.mxu0 0.0
    %116 = vmatprep.subr.mxu0 0.0
    %117 = vmatpush1.msra.mxu0 0.0
    %118 = vmatprep.subr.mxu0 0.0
    %119 = vmatpush1.msra.mxu0 0.0
    %120 = vmatprep.subr.mxu0 0.0
    %121 = vmatpush1.msra.mxu0 0.0
    %122 = vmatprep.subr.mxu0 0.0
    %123 = vmatpush1.msra.mxu0 0.0
    %124 = vmatprep.subr.mxu0 0.0
    %125 = vmatpush1.msra.mxu0 0.0
    %126 = vmatprep.subr.mxu0 0.0
    %127 = vmatpush1.msra.mxu0 0.0
    %128 = vmatprep.subr.mxu0 0.0
    %129 = vmatpush1.msra.mxu0 0.0
    %130 = vmatprep.subr.mxu0 0.0
    %131 = vmatpush1.msra.mxu0 0.0
    %132 = vmatprep.subr.mxu0 0.0
    %133 = vmatpush1.msra.mxu0 0.0
    %134 = vmatprep.subr.mxu0 0.0
    %135 = vmatpush1.msra.mxu0 0.0
    %136 = vmatprep.subr.mxu0 0.0
    %137 = vmatpush1.msra.mxu0 0.0
    %138 = vmatprep.mubr.f32.mxu0 0.0
    %139 = vmatmul.mubr.f32.gmra.mrb[0].mxu0 %v68
    %v140 = vpop.f32.mrb[0].mxu0
    %v141 = vadd.f32 0.0, %v140
    %v142 = vpop.f32.mrb[0].mxu0
    %143 = vdwg.mxu0
    %v144 = vld [vmem:[%s2] sm:$0xff]
    %v145 = vld [vmem:[%s2 + $0x8] sm:$0xff]
    %v146 = vld [vmem:[%s2 + $0x10] sm:$0xff]
    %v147 = vld [vmem:[%s2 + $0x18] sm:$0xff]
    %v148 = vld [vmem:[%s2 + $0x20] sm:$0xff]
    %v149 = vld [vmem:[%s2 + $0x28] sm:$0xff]
    %v150 = vld [vmem:[%s2 + $0x30] sm:$0xff]
    %v151 = vld [vmem:[%s2 + $0x38] sm:$0xff]
    %v152 = vld [vmem:[%s3] sm:$0x1]
    %v153 = vlaneseq
    %v154 = vshrl.u32 %v153, 7
    %v155 = vsub.s32 0, %v154
    %v156 = vrot.slane %v152, %v155
    %vm157 = vcmask 523264
    %v159 = vsel %vm157, %v141, 0
    %161 = vmatprep.subr.mxu0 0.0
    %162 = vmatpush1.msra.mxu0 %v144
    %163 = vmatprep.subr.mxu0 0.0
    %164 = vmatpush1.msra.mxu0 %v145
    %165 = vmatprep.subr.mxu0 0.0
    %166 = vmatpush1.msra.mxu0 %v146
    %167 = vmatprep.subr.mxu0 0.0
    %168 = vmatpush1.msra.mxu0 %v147
    %169 = vmatprep.subr.mxu0 0.0
    %170 = vmatpush1.msra.mxu0 %v148
    %171 = vmatprep.subr.mxu0 0.0
    %172 = vmatpush1.msra.mxu0 %v149
    %173 = vmatprep.subr.mxu0 0.0
    %174 = vmatpush1.msra.mxu0 %v150
    %175 = vmatprep.subr.mxu0 0.0
    %176 = vmatpush1.msra.mxu0 %v151
    %177 = vmatprep.subr.mxu0 0.0
    %178 = vmatpush1.msra.mxu0 0.0
    %179 = vmatprep.subr.mxu0 0.0
    %180 = vmatpush1.msra.mxu0 0.0
    %181 = vmatprep.subr.mxu0 0.0
    %182 = vmatpush1.msra.mxu0 0.0
    %183 = vmatprep.subr.mxu0 0.0
    %184 = vmatpush1.msra.mxu0 0.0
    %185 = vmatprep.subr.mxu0 0.0
    %186 = vmatpush1.msra.mxu0 0.0
    %187 = vmatprep.subr.mxu0 0.0
    %188 = vmatpush1.msra.mxu0 0.0
    %189 = vmatprep.subr.mxu0 0.0
    %190 = vmatpush1.msra.mxu0 0.0
    %191 = vmatprep.subr.mxu0 0.0
    %192 = vmatpush1.msra.mxu0 0.0
    %193 = vmatprep.subr.mxu0 0.0
    %194 = vmatpush1.msra.mxu0 0.0
    %195 = vmatprep.subr.mxu0 0.0
    %196 = vmatpush1.msra.mxu0 0.0
    %197 = vmatprep.subr.mxu0 0.0
    %198 = vmatpush1.msra.mxu0 0.0
    %199 = vmatprep.subr.mxu0 0.0
    %200 = vmatpush1.msra.mxu0 0.0
    %201 = vmatprep.subr.mxu0 0.0
    %202 = vmatpush1.msra.mxu0 0.0
    %203 = vmatprep.subr.mxu0 0.0
    %204 = vmatpush1.msra.mxu0 0.0
    %205 = vmatprep.subr.mxu0 0.0
    %206 = vmatpush1.msra.mxu0 0.0
    %207 = vmatprep.subr.mxu0 0.0
    %208 = vmatpush1.msra.mxu0 0.0
    %209 = vmatprep.subr.mxu0 0.0
    %210 = vmatpush1.msra.mxu0 0.0
    %211 = vmatprep.subr.mxu0 0.0
    %212 = vmatpush1.msra.mxu0 0.0
    %213 = vmatprep.subr.mxu0 0.0
    %214 = vmatpush1.msra.mxu0 0.0
    %215 = vmatprep.subr.mxu0 0.0
    %216 = vmatpush1.msra.mxu0 0.0
    %217 = vmatprep.subr.mxu0 0.0
    %218 = vmatpush1.msra.mxu0 0.0
    %219 = vmatprep.subr.mxu0 0.0
    %220 = vmatpush1.msra.mxu0 0.0
    %221 = vmatprep.subr.mxu0 0.0
    %222 = vmatpush1.msra.mxu0 0.0
    %223 = vmatprep.subr.mxu0 0.0
    %224 = vmatpush1.msra.mxu0 0.0
    %225 = vmatprep.mubr.f32.mxu0 0.0
    %226 = vmatmul.mubr.f32.gmra.mrb[0].mxu0 %v159
    %v227 = vpop.f32.mrb[0].mxu0
    %v228 = vadd.f32 %v156, %v227
    %v229 = vpop.f32.mrb[0].mxu0
    %230 = vdwg.mxu0
    %v231 = vxor.u32 %v228, 2147483648
    %v232 = vmul.f32 %v231, 1.442695
    %v233 = vpow.pop %v232
    %v234 = vadd.f32 %v233, 1.0
    %v235 = vrcp.pop %v234
    %v236 = vmul.f32 1.0, %v235
    %v237 = vmul.f32 %v228, %v236
    %v238 = vld [vmem:[%s2 + $0x40] sm:$0xff]
    %v239 = vld [vmem:[%s2 + $0x48] sm:$0xff]
    %v240 = vld [vmem:[%s2 + $0x50] sm:$0xff]
    %v241 = vld [vmem:[%s2 + $0x58] sm:$0xff]
    %v242 = vld [vmem:[%s2 + $0x60] sm:$0xff]
    %v243 = vld [vmem:[%s2 + $0x68] sm:$0xff]
    %v244 = vld [vmem:[%s2 + $0x70] sm:$0xff]
    %v245 = vld [vmem:[%s2 + $0x78] sm:$0xff]
    %v246 = vld [vmem:[%s3 + $0x1] sm:$0x1]
    %v247 = vlaneseq
    %v248 = vshrl.u32 %v247, 7
    %v249 = vsub.s32 0, %v248
    %v250 = vrot.slane %v246, %v249
    %v252 = vsel %vm157, %v237, 0
    %254 = vmatprep.subr.mxu0 0.0
    %255 = vmatpush1.msra.mxu0 %v238
    %256 = vmatprep.subr.mxu0 0.0
    %257 = vmatpush1.msra.mxu0 %v239
    %258 = vmatprep.subr.mxu0 0.0
    %259 = vmatpush1.msra.mxu0 %v240
    %260 = vmatprep.subr.mxu0 0.0
    %261 = vmatpush1.msra.mxu0 %v241
    %262 = vmatprep.subr.mxu0 0.0
    %263 = vmatpush1.msra.mxu0 %v242
    %264 = vmatprep.subr.mxu0 0.0
    %265 = vmatpush1.msra.mxu0 %v243
    %266 = vmatprep.subr.mxu0 0.0
    %267 = vmatpush1.msra.mxu0 %v244
    %268 = vmatprep.subr.mxu0 0.0
    %269 = vmatpush1.msra.mxu0 %v245
    %270 = vmatprep.subr.mxu0 0.0
    %271 = vmatpush1.msra.mxu0 0.0
    %272 = vmatprep.subr.mxu0 0.0
    %273 = vmatpush1.msra.mxu0 0.0
    %274 = vmatprep.subr.mxu0 0.0
    %275 = vmatpush1.msra.mxu0 0.0
    %276 = vmatprep.subr.mxu0 0.0
    %277 = vmatpush1.msra.mxu0 0.0
    %278 = vmatprep.subr.mxu0 0.0
    %279 = vmatpush1.msra.mxu0 0.0
    %280 = vmatprep.subr.mxu0 0.0
    %281 = vmatpush1.msra.mxu0 0.0
    %282 = vmatprep.subr.mxu0 0.0
    %283 = vmatpush1.msra.mxu0 0.0
    %284 = vmatprep.subr.mxu0 0.0
    %285 = vmatpush1.msra.mxu0 0.0
    %286 = vmatprep.subr.mxu0 0.0
    %287 = vmatpush1.msra.mxu0 0.0
    %288 = vmatprep.subr.mxu0 0.0
    %289 = vmatpush1.msra.mxu0 0.0
    %290 = vmatprep.subr.mxu0 0.0
    %291 = vmatpush1.msra.mxu0 0.0
    %292 = vmatprep.subr.mxu0 0.0
    %293 = vmatpush1.msra.mxu0 0.0
    %294 = vmatprep.subr.mxu0 0.0
    %295 = vmatpush1.msra.mxu0 0.0
    %296 = vmatprep.subr.mxu0 0.0
    %297 = vmatpush1.msra.mxu0 0.0
    %298 = vmatprep.subr.mxu0 0.0
    %299 = vmatpush1.msra.mxu0 0.0
    %300 = vmatprep.subr.mxu0 0.0
    %301 = vmatpush1.msra.mxu0 0.0
    %302 = vmatprep.subr.mxu0 0.0
    %303 = vmatpush1.msra.mxu0 0.0
    %304 = vmatprep.subr.mxu0 0.0
    %305 = vmatpush1.msra.mxu0 0.0
    %306 = vmatprep.subr.mxu0 0.0
    %307 = vmatpush1.msra.mxu0 0.0
    %308 = vmatprep.subr.mxu0 0.0
    %309 = vmatpush1.msra.mxu0 0.0
    %310 = vmatprep.subr.mxu0 0.0
    %311 = vmatpush1.msra.mxu0 0.0
    %312 = vmatprep.subr.mxu0 0.0
    %313 = vmatpush1.msra.mxu0 0.0
    %314 = vmatprep.subr.mxu0 0.0
    %315 = vmatpush1.msra.mxu0 0.0
    %316 = vmatprep.subr.mxu0 0.0
    %317 = vmatpush1.msra.mxu0 0.0
    %318 = vmatprep.mubr.f32.mxu0 0.0
    %319 = vmatmul.mubr.f32.gmra.mrb[0].mxu0 %v252
    %v320 = vpop.f32.mrb[0].mxu0
    %v321 = vadd.f32 %v250, %v320
    %v322 = vpop.f32.mrb[0].mxu0
    %323 = vdwg.mxu0
    %324 = vst.msk [vmem:[#allocation2] sm:$0xff] %vm157, %v321
    // Predicated region
    $region18: #{tpu_custom_call.1} parent=1 // pred_check
      _
    $region19: #{tpu_custom_call.1} parent=1 // pred_check_branch
      %326 = sbr.rel (0) target = $region21
    $region20: #{tpu_custom_call.1} parent=1 // pred_region
      %s328 = ssub.s32 128, 128
      %329 = vsyncadd [#allocation3], %s328
      %s331 = sshll.u32 [#allocation2], 4
      %s332 = int_to_ptr.vmem [resolvable:$true] %s331
      %334 = dma.vmem_to_hbm [thread:$0]  %s332, 128, %s4, [#allocation3]
    $region21: #{tpu_custom_call.1} parent=1 // pred_fallthru
      _
    // Predicated region
    $region22: #{tpu_custom_call.1} parent=1 // pred_check
      _
    $region23: #{tpu_custom_call.1} parent=1 // pred_check_branch
      %336 = sbr.rel (0) target = $region25
    $region24: #{tpu_custom_call.1} parent=1 // pred_region
      %337 = dma.done [#allocation3], 128
    $region25: #{tpu_custom_call.1} parent=1 // pred_fallthru
      _
    %338 = vsyncpa [#allocation3], 1

</llo_original>
